<compile_context>
chip_gen: v5e
topology: v5e:2x2
jax: 0.10.0
libtpu: 0.0.40
codegen_flags: <defaults>
</compile_context>

<pallas_src>
import jax
import jax.numpy as jnp
from jax import lax
from jax.experimental import pallas as pl
from jax.experimental.pallas import tpu as pltpu


NELEC = 4      # mol.nelec
NDIM = 3       # self.ndim
LANE = 128     # TPU lane width
MAX_SG = 256   # max 128-walker groups per grid step (~3 MiB of I/O per step)


def _backflow_kernel(w_ref, pos_ref, out_ref):
    """One block of the backflow transformation.

    w_ref   : SMEM (1, 1) f32                   -- BackFlowKernelInverse weight
    pos_ref : VMEM (NELEC, NDIM, SG, 128) f32   -- batch packed on sublane x lane
    out_ref : VMEM (NELEC, NDIM, SG, 128) f32
    """
    w = w_ref[0, 0]
    r = pos_ref[...]                                       # (N, 3, SG, 128)

    acc = [jnp.zeros_like(r[0]) for _ in range(NELEC)]     # each (3, SG, 128)

    # Unrolled upper-triangle pair loop; exploits eta_ij == eta_ji.
    for i in range(NELEC):
        ri = r[i]
        for j in range(i + 1, NELEC):
            d = ri - r[j]                                  # (3, SG, 128)
            s = d[0] * d[0] + d[1] * d[1] + d[2] * d[2]    # (SG, 128)
            eta = w * lax.rsqrt(s)                         # EUP; == w / ||r_i - r_j||
            t = eta[None, :, :] * d                        # (3, SG, 128)
            acc[i] = acc[i] + t
            acc[j] = acc[j] - t

    for i in range(NELEC):
        out_ref[i] = r[i] + acc[i]                         # q_i = r_i + sum_j eta*(r_i-r_j)


def _pick_block_groups(ngroups: int) -> int:
    """Number of 128-walker groups per grid step (sublane-axis block size)."""
    if ngroups <= 8:
        return ngroups                 # single full-extent block (allowed: == array dim)
    # Multiple of 8 (sublane tiling), capped for VMEM, and small enough that the
    # grid has >= 2 parallel steps (v7x megacore sharding).
    half = (ngroups + 1) // 2
    sg = ((half + 7) // 8) * 8
    return min(MAX_SG, sg)


def backflow_transformation_packed(pos_packed, weight):
    """Backflow transform in the resident lane-major layout.

    pos_packed : (NELEC, NDIM, G, 128) f32, walker b = g*128 + lane
    weight     : scalar (BackFlowKernelInverse weight)
    returns    : (NELEC, NDIM, G, 128) f32 transformed coordinates
    """
    nelec, ndim, ngroups, lane = pos_packed.shape
    assert (nelec, ndim, lane) == (NELEC, NDIM, LANE)

    sg = _pick_block_groups(ngroups)
    grid = (pl.cdiv(ngroups, sg),)     # ragged last block clipped by Pallas
    w = jnp.asarray(weight, jnp.float32).reshape(1, 1)

    return pl.pallas_call(
        _backflow_kernel,
        out_shape=jax.ShapeDtypeStruct(pos_packed.shape, jnp.float32),
        grid_spec=pltpu.PrefetchScalarGridSpec(
            num_scalar_prefetch=0,
            grid=grid,
            in_specs=[
                pl.BlockSpec(memory_space=pltpu.MemorySpace.SMEM),            # weight
                pl.BlockSpec((NELEC, NDIM, sg, LANE), lambda g: (0, 0, g, 0)),  # positions
            ],
            out_specs=pl.BlockSpec((NELEC, NDIM, sg, LANE), lambda g: (0, 0, g, 0)),
        ),
        compiler_params=pltpu.CompilerParams(
            dimension_semantics=("parallel",),
            vmem_limit_bytes=48 * 1024 * 1024,   # explicit budget, portable to v7x 64 MiB
        ),
    )(w, pos_packed)


def to_packed(pos):
    """(B, NELEC*NDIM) -> (NELEC, NDIM, G, 128); pads <= 127 walkers (edge-replicated)."""
    nbatch = pos.shape[0]
    ngroups = -(-nbatch // LANE)
    npad = ngroups * LANE
    p = pos.astype(jnp.float32)
    if npad != nbatch:
        # edge replication keeps padded lanes finite (no rsqrt(0) -> inf/NaN anywhere)
        p = jnp.pad(p, ((0, npad - nbatch), (0, 0)), mode="edge")
    r = p.reshape(npad, NELEC, NDIM)
    return jnp.transpose(r, (1, 2, 0)).reshape(NELEC, NDIM, ngroups, LANE)


def from_packed(q_packed, nbatch):
    """(NELEC, NDIM, G, 128) -> (B, NELEC*NDIM)."""
    npad = q_packed.shape[2] * LANE
    q = jnp.transpose(q_packed.reshape(NELEC, NDIM, npad), (2, 0, 1))
    return q.reshape(npad, NELEC * NDIM)[:nbatch]


@jax.jit
def backflow_transformation(pos, weight):
    """PyTorch-interface wrapper: pos (B, NELEC*NDIM) -> (B, NELEC*NDIM).

    In a production QMC loop prefer backflow_transformation_packed and keep the
    packed layout resident; this wrapper pays one layout swizzle each way.
    """
    nbatch = pos.shape[0]
    return from_packed(backflow_transformation_packed(to_packed(pos), weight), nbatch)


def backflow_reference(pos, weight):
    """Pure-JAX reference matching the PyTorch forward (derivative=0)."""
    nbatch = pos.shape[0]
    r = pos.reshape(nbatch, NELEC, NDIM).astype(jnp.float32)
    diff = r[:, :, None, :] - r[:, None, :, :]           # delta_ee[b, i, j] = r_i - r_j
    ree = jnp.sqrt(jnp.sum(diff * diff, axis=-1))
    eye = jnp.eye(NELEC, dtype=r.dtype)
    eta = weight * (1.0 - eye) * (1.0 / (ree + eye) - eye)
    q = r + jnp.sum(eta[..., None] * diff, axis=2)
    return q.reshape(nbatch, NELEC * NDIM)


if __name__ == "__main__":
    key = jax.random.PRNGKey(0)
    weight = jnp.float32(0.8)          # BackFlowKernelInverse weight

    # small demo shapes: single lane-group batch, and a multi-group ragged batch
    for nbatch in (8, 200):
        k = jax.random.fold_in(key, nbatch)
        pos = jax.random.normal(k, (nbatch, NELEC * NDIM), dtype=jnp.float32)

        out = jax.block_until_ready(backflow_transformation(pos, weight))
        ref = backflow_reference(pos, weight)

        assert out.shape == (nbatch, NELEC * NDIM)
        assert jnp.allclose(out, ref, atol=1e-5, rtol=1e-4), f"mismatch vs reference (nbatch={nbatch})"

    print("KERNEL_OK")
</pallas_src>

<mosaic_0001>
module attributes {stable_mosaic.version = 11 : i64} {
  func.func @_backflow_kernel(%arg0: i32, %arg1: memref<1x1xf32, #tpu.memory_space<smem>>, %arg2: memref<4x3x1x128xf32, #tpu.memory_space<vmem>>, %arg3: memref<4x3x1x128xf32, #tpu.memory_space<vmem>>) attributes {dimension_semantics = [#tpu.dimension_semantics<parallel>], iteration_bounds = array<i64: 1>, scalar_prefetch = 0 : i64, scratch_operands = 0 : i64, tpu.core_type = #tpu.core_type<tc>, window_params = [{transform_indices = @transform_0, window_bounds = array<i64: 1, 1>}, {transform_indices = @transform_1, window_bounds = array<i64: 4, 3, 1, 128>}, {transform_indices = @transform_2, window_bounds = array<i64: 4, 3, 1, 128>}]} {
    %c0 = arith.constant 0 : index
    %c0_0 = arith.constant 0 : index
    %0 = memref.load %arg1[%c0, %c0_0] : memref<1x1xf32, #tpu.memory_space<smem>>
    %c0_1 = arith.constant 0 : index
    %c0_2 = arith.constant 0 : index
    %c0_3 = arith.constant 0 : index
    %c0_4 = arith.constant 0 : index
    %1 = vector.load %arg2[%c0_1, %c0_2, %c0_3, %c0_4] : memref<4x3x1x128xf32, #tpu.memory_space<vmem>>, vector<4x3x1x128xf32>
    %cst = arith.constant 0.000000e+00 : f32
    %2 = vector.broadcast %cst : f32 to vector<3x1x128xf32>
    %cst_5 = arith.constant 0.000000e+00 : f32
    %3 = vector.broadcast %cst_5 : f32 to vector<3x1x128xf32>
    %cst_6 = arith.constant 0.000000e+00 : f32
    %4 = vector.broadcast %cst_6 : f32 to vector<3x1x128xf32>
    %cst_7 = arith.constant 0.000000e+00 : f32
    %5 = vector.broadcast %cst_7 : f32 to vector<3x1x128xf32>
    %6 = vector.extract_strided_slice %1 {offsets = [0, 0, 0, 0], sizes = [1, 3, 1, 128], strides = [1, 1, 1, 1]} : vector<4x3x1x128xf32> to vector<1x3x1x128xf32>
    %7 = vector.shape_cast %6 : vector<1x3x1x128xf32> to vector<3x1x128xf32>
    %8 = vector.extract_strided_slice %1 {offsets = [1, 0, 0, 0], sizes = [1, 3, 1, 128], strides = [1, 1, 1, 1]} : vector<4x3x1x128xf32> to vector<1x3x1x128xf32>
    %9 = vector.shape_cast %8 : vector<1x3x1x128xf32> to vector<3x1x128xf32>
    %10 = arith.subf %7, %9 : vector<3x1x128xf32>
    %11 = vector.extract_strided_slice %10 {offsets = [0, 0, 0], sizes = [1, 1, 128], strides = [1, 1, 1]} : vector<3x1x128xf32> to vector<1x1x128xf32>
    %12 = vector.shape_cast %11 : vector<1x1x128xf32> to vector<1x128xf32>
    %13 = vector.extract_strided_slice %10 {offsets = [0, 0, 0], sizes = [1, 1, 128], strides = [1, 1, 1]} : vector<3x1x128xf32> to vector<1x1x128xf32>
    %14 = vector.shape_cast %13 : vector<1x1x128xf32> to vector<1x128xf32>
    %15 = arith.mulf %12, %14 : vector<1x128xf32>
    %16 = vector.extract_strided_slice %10 {offsets = [1, 0, 0], sizes = [1, 1, 128], strides = [1, 1, 1]} : vector<3x1x128xf32> to vector<1x1x128xf32>
    %17 = vector.shape_cast %16 : vector<1x1x128xf32> to vector<1x128xf32>
    %18 = vector.extract_strided_slice %10 {offsets = [1, 0, 0], sizes = [1, 1, 128], strides = [1, 1, 1]} : vector<3x1x128xf32> to vector<1x1x128xf32>
    %19 = vector.shape_cast %18 : vector<1x1x128xf32> to vector<1x128xf32>
    %20 = arith.mulf %17, %19 : vector<1x128xf32>
    %21 = arith.addf %15, %20 : vector<1x128xf32>
    %22 = vector.extract_strided_slice %10 {offsets = [2, 0, 0], sizes = [1, 1, 128], strides = [1, 1, 1]} : vector<3x1x128xf32> to vector<1x1x128xf32>
    %23 = vector.shape_cast %22 : vector<1x1x128xf32> to vector<1x128xf32>
    %24 = vector.extract_strided_slice %10 {offsets = [2, 0, 0], sizes = [1, 1, 128], strides = [1, 1, 1]} : vector<3x1x128xf32> to vector<1x1x128xf32>
    %25 = vector.shape_cast %24 : vector<1x1x128xf32> to vector<1x128xf32>
    %26 = arith.mulf %23, %25 : vector<1x128xf32>
    %27 = arith.addf %21, %26 : vector<1x128xf32>
    %28 = math.rsqrt %27 : vector<1x128xf32>
    %29 = vector.broadcast %0 : f32 to vector<1x128xf32>
    %30 = arith.mulf %29, %28 : vector<1x128xf32>
    %31 = vector.shape_cast %30 : vector<1x128xf32> to vector<1x1x128xf32>
    %32 = vector.broadcast %31 : vector<1x1x128xf32> to vector<3x1x128xf32>
    %33 = arith.mulf %32, %10 : vector<3x1x128xf32>
    %34 = arith.addf %2, %33 : vector<3x1x128xf32>
    %35 = arith.subf %3, %33 : vector<3x1x128xf32>
    %36 = vector.extract_strided_slice %1 {offsets = [2, 0, 0, 0], sizes = [1, 3, 1, 128], strides = [1, 1, 1, 1]} : vector<4x3x1x128xf32> to vector<1x3x1x128xf32>
    %37 = vector.shape_cast %36 : vector<1x3x1x128xf32> to vector<3x1x128xf32>
    %38 = arith.subf %7, %37 : vector<3x1x128xf32>
    %39 = vector.extract_strided_slice %38 {offsets = [0, 0, 0], sizes = [1, 1, 128], strides = [1, 1, 1]} : vector<3x1x128xf32> to vector<1x1x128xf32>
    %40 = vector.shape_cast %39 : vector<1x1x128xf32> to vector<1x128xf32>
    %41 = vector.extract_strided_slice %38 {offsets = [0, 0, 0], sizes = [1, 1, 128], strides = [1, 1, 1]} : vector<3x1x128xf32> to vector<1x1x128xf32>
    %42 = vector.shape_cast %41 : vector<1x1x128xf32> to vector<1x128xf32>
    %43 = arith.mulf %40, %42 : vector<1x128xf32>
    %44 = vector.extract_strided_slice %38 {offsets = [1, 0, 0], sizes = [1, 1, 128], strides = [1, 1, 1]} : vector<3x1x128xf32> to vector<1x1x128xf32>
    %45 = vector.shape_cast %44 : vector<1x1x128xf32> to vector<1x128xf32>
    %46 = vector.extract_strided_slice %38 {offsets = [1, 0, 0], sizes = [1, 1, 128], strides = [1, 1, 1]} : vector<3x1x128xf32> to vector<1x1x128xf32>
    %47 = vector.shape_cast %46 : vector<1x1x128xf32> to vector<1x128xf32>
    %48 = arith.mulf %45, %47 : vector<1x128xf32>
    %49 = arith.addf %43, %48 : vector<1x128xf32>
    %50 = vector.extract_strided_slice %38 {offsets = [2, 0, 0], sizes = [1, 1, 128], strides = [1, 1, 1]} : vector<3x1x128xf32> to vector<1x1x128xf32>
    %51 = vector.shape_cast %50 : vector<1x1x128xf32> to vector<1x128xf32>
    %52 = vector.extract_strided_slice %38 {offsets = [2, 0, 0], sizes = [1, 1, 128], strides = [1, 1, 1]} : vector<3x1x128xf32> to vector<1x1x128xf32>
    %53 = vector.shape_cast %52 : vector<1x1x128xf32> to vector<1x128xf32>
    %54 = arith.mulf %51, %53 : vector<1x128xf32>
    %55 = arith.addf %49, %54 : vector<1x128xf32>
    %56 = math.rsqrt %55 : vector<1x128xf32>
    %57 = vector.broadcast %0 : f32 to vector<1x128xf32>
    %58 = arith.mulf %57, %56 : vector<1x128xf32>
    %59 = vector.shape_cast %58 : vector<1x128xf32> to vector<1x1x128xf32>
    %60 = vector.broadcast %59 : vector<1x1x128xf32> to vector<3x1x128xf32>
    %61 = arith.mulf %60, %38 : vector<3x1x128xf32>
    %62 = arith.addf %34, %61 : vector<3x1x128xf32>
    %63 = arith.subf %4, %61 : vector<3x1x128xf32>
    %64 = vector.extract_strided_slice %1 {offsets = [3, 0, 0, 0], sizes = [1, 3, 1, 128], strides = [1, 1, 1, 1]} : vector<4x3x1x128xf32> to vector<1x3x1x128xf32>
    %65 = vector.shape_cast %64 : vector<1x3x1x128xf32> to vector<3x1x128xf32>
    %66 = arith.subf %7, %65 : vector<3x1x128xf32>
    %67 = vector.extract_strided_slice %66 {offsets = [0, 0, 0], sizes = [1, 1, 128], strides = [1, 1, 1]} : vector<3x1x128xf32> to vector<1x1x128xf32>
    %68 = vector.shape_cast %67 : vector<1x1x128xf32> to vector<1x128xf32>
    %69 = vector.extract_strided_slice %66 {offsets = [0, 0, 0], sizes = [1, 1, 128], strides = [1, 1, 1]} : vector<3x1x128xf32> to vector<1x1x128xf32>
    %70 = vector.shape_cast %69 : vector<1x1x128xf32> to vector<1x128xf32>
    %71 = arith.mulf %68, %70 : vector<1x128xf32>
    %72 = vector.extract_strided_slice %66 {offsets = [1, 0, 0], sizes = [1, 1, 128], strides = [1, 1, 1]} : vector<3x1x128xf32> to vector<1x1x128xf32>
    %73 = vector.shape_cast %72 : vector<1x1x128xf32> to vector<1x128xf32>
    %74 = vector.extract_strided_slice %66 {offsets = [1, 0, 0], sizes = [1, 1, 128], strides = [1, 1, 1]} : vector<3x1x128xf32> to vector<1x1x128xf32>
    %75 = vector.shape_cast %74 : vector<1x1x128xf32> to vector<1x128xf32>
    %76 = arith.mulf %73, %75 : vector<1x128xf32>
    %77 = arith.addf %71, %76 : vector<1x128xf32>
    %78 = vector.extract_strided_slice %66 {offsets = [2, 0, 0], sizes = [1, 1, 128], strides = [1, 1, 1]} : vector<3x1x128xf32> to vector<1x1x128xf32>
    %79 = vector.shape_cast %78 : vector<1x1x128xf32> to vector<1x128xf32>
    %80 = vector.extract_strided_slice %66 {offsets = [2, 0, 0], sizes = [1, 1, 128], strides = [1, 1, 1]} : vector<3x1x128xf32> to vector<1x1x128xf32>
    %81 = vector.shape_cast %80 : vector<1x1x128xf32> to vector<1x128xf32>
    %82 = arith.mulf %79, %81 : vector<1x128xf32>
    %83 = arith.addf %77, %82 : vector<1x128xf32>
    %84 = math.rsqrt %83 : vector<1x128xf32>
    %85 = vector.broadcast %0 : f32 to vector<1x128xf32>
    %86 = arith.mulf %85, %84 : vector<1x128xf32>
    %87 = vector.shape_cast %86 : vector<1x128xf32> to vector<1x1x128xf32>
    %88 = vector.broadcast %87 : vector<1x1x128xf32> to vector<3x1x128xf32>
    %89 = arith.mulf %88, %66 : vector<3x1x128xf32>
    %90 = arith.addf %62, %89 : vector<3x1x128xf32>
    %91 = arith.subf %5, %89 : vector<3x1x128xf32>
    %92 = vector.extract_strided_slice %1 {offsets = [1, 0, 0, 0], sizes = [1, 3, 1, 128], strides = [1, 1, 1, 1]} : vector<4x3x1x128xf32> to vector<1x3x1x128xf32>
    %93 = vector.shape_cast %92 : vector<1x3x1x128xf32> to vector<3x1x128xf32>
    %94 = vector.extract_strided_slice %1 {offsets = [2, 0, 0, 0], sizes = [1, 3, 1, 128], strides = [1, 1, 1, 1]} : vector<4x3x1x128xf32> to vector<1x3x1x128xf32>
    %95 = vector.shape_cast %94 : vector<1x3x1x128xf32> to vector<3x1x128xf32>
    %96 = arith.subf %93, %95 : vector<3x1x128xf32>
    %97 = vector.extract_strided_slice %96 {offsets = [0, 0, 0], sizes = [1, 1, 128], strides = [1, 1, 1]} : vector<3x1x128xf32> to vector<1x1x128xf32>
    %98 = vector.shape_cast %97 : vector<1x1x128xf32> to vector<1x128xf32>
    %99 = vector.extract_strided_slice %96 {offsets = [0, 0, 0], sizes = [1, 1, 128], strides = [1, 1, 1]} : vector<3x1x128xf32> to vector<1x1x128xf32>
    %100 = vector.shape_cast %99 : vector<1x1x128xf32> to vector<1x128xf32>
    %101 = arith.mulf %98, %100 : vector<1x128xf32>
    %102 = vector.extract_strided_slice %96 {offsets = [1, 0, 0], sizes = [1, 1, 128], strides = [1, 1, 1]} : vector<3x1x128xf32> to vector<1x1x128xf32>
    %103 = vector.shape_cast %102 : vector<1x1x128xf32> to vector<1x128xf32>
    %104 = vector.extract_strided_slice %96 {offsets = [1, 0, 0], sizes = [1, 1, 128], strides = [1, 1, 1]} : vector<3x1x128xf32> to vector<1x1x128xf32>
    %105 = vector.shape_cast %104 : vector<1x1x128xf32> to vector<1x128xf32>
    %106 = arith.mulf %103, %105 : vector<1x128xf32>
    %107 = arith.addf %101, %106 : vector<1x128xf32>
    %108 = vector.extract_strided_slice %96 {offsets = [2, 0, 0], sizes = [1, 1, 128], strides = [1, 1, 1]} : vector<3x1x128xf32> to vector<1x1x128xf32>
    %109 = vector.shape_cast %108 : vector<1x1x128xf32> to vector<1x128xf32>
    %110 = vector.extract_strided_slice %96 {offsets = [2, 0, 0], sizes = [1, 1, 128], strides = [1, 1, 1]} : vector<3x1x128xf32> to vector<1x1x128xf32>
    %111 = vector.shape_cast %110 : vector<1x1x128xf32> to vector<1x128xf32>
    %112 = arith.mulf %109, %111 : vector<1x128xf32>
    %113 = arith.addf %107, %112 : vector<1x128xf32>
    %114 = math.rsqrt %113 : vector<1x128xf32>
    %115 = vector.broadcast %0 : f32 to vector<1x128xf32>
    %116 = arith.mulf %115, %114 : vector<1x128xf32>
    %117 = vector.shape_cast %116 : vector<1x128xf32> to vector<1x1x128xf32>
    %118 = vector.broadcast %117 : vector<1x1x128xf32> to vector<3x1x128xf32>
    %119 = arith.mulf %118, %96 : vector<3x1x128xf32>
    %120 = arith.addf %35, %119 : vector<3x1x128xf32>
    %121 = arith.subf %63, %119 : vector<3x1x128xf32>
    %122 = vector.extract_strided_slice %1 {offsets = [3, 0, 0, 0], sizes = [1, 3, 1, 128], strides = [1, 1, 1, 1]} : vector<4x3x1x128xf32> to vector<1x3x1x128xf32>
    %123 = vector.shape_cast %122 : vector<1x3x1x128xf32> to vector<3x1x128xf32>
    %124 = arith.subf %93, %123 : vector<3x1x128xf32>
    %125 = vector.extract_strided_slice %124 {offsets = [0, 0, 0], sizes = [1, 1, 128], strides = [1, 1, 1]} : vector<3x1x128xf32> to vector<1x1x128xf32>
    %126 = vector.shape_cast %125 : vector<1x1x128xf32> to vector<1x128xf32>
    %127 = vector.extract_strided_slice %124 {offsets = [0, 0, 0], sizes = [1, 1, 128], strides = [1, 1, 1]} : vector<3x1x128xf32> to vector<1x1x128xf32>
    %128 = vector.shape_cast %127 : vector<1x1x128xf32> to vector<1x128xf32>
    %129 = arith.mulf %126, %128 : vector<1x128xf32>
    %130 = vector.extract_strided_slice %124 {offsets = [1, 0, 0], sizes = [1, 1, 128], strides = [1, 1, 1]} : vector<3x1x128xf32> to vector<1x1x128xf32>
    %131 = vector.shape_cast %130 : vector<1x1x128xf32> to vector<1x128xf32>
    %132 = vector.extract_strided_slice %124 {offsets = [1, 0, 0], sizes = [1, 1, 128], strides = [1, 1, 1]} : vector<3x1x128xf32> to vector<1x1x128xf32>
    %133 = vector.shape_cast %132 : vector<1x1x128xf32> to vector<1x128xf32>
    %134 = arith.mulf %131, %133 : vector<1x128xf32>
    %135 = arith.addf %129, %134 : vector<1x128xf32>
    %136 = vector.extract_strided_slice %124 {offsets = [2, 0, 0], sizes = [1, 1, 128], strides = [1, 1, 1]} : vector<3x1x128xf32> to vector<1x1x128xf32>
    %137 = vector.shape_cast %136 : vector<1x1x128xf32> to vector<1x128xf32>
    %138 = vector.extract_strided_slice %124 {offsets = [2, 0, 0], sizes = [1, 1, 128], strides = [1, 1, 1]} : vector<3x1x128xf32> to vector<1x1x128xf32>
    %139 = vector.shape_cast %138 : vector<1x1x128xf32> to vector<1x128xf32>
    %140 = arith.mulf %137, %139 : vector<1x128xf32>
    %141 = arith.addf %135, %140 : vector<1x128xf32>
    %142 = math.rsqrt %141 : vector<1x128xf32>
    %143 = vector.broadcast %0 : f32 to vector<1x128xf32>
    %144 = arith.mulf %143, %142 : vector<1x128xf32>
    %145 = vector.shape_cast %144 : vector<1x128xf32> to vector<1x1x128xf32>
    %146 = vector.broadcast %145 : vector<1x1x128xf32> to vector<3x1x128xf32>
    %147 = arith.mulf %146, %124 : vector<3x1x128xf32>
    %148 = arith.addf %120, %147 : vector<3x1x128xf32>
    %149 = arith.subf %91, %147 : vector<3x1x128xf32>
    %150 = vector.extract_strided_slice %1 {offsets = [2, 0, 0, 0], sizes = [1, 3, 1, 128], strides = [1, 1, 1, 1]} : vector<4x3x1x128xf32> to vector<1x3x1x128xf32>
    %151 = vector.shape_cast %150 : vector<1x3x1x128xf32> to vector<3x1x128xf32>
    %152 = vector.extract_strided_slice %1 {offsets = [3, 0, 0, 0], sizes = [1, 3, 1, 128], strides = [1, 1, 1, 1]} : vector<4x3x1x128xf32> to vector<1x3x1x128xf32>
    %153 = vector.shape_cast %152 : vector<1x3x1x128xf32> to vector<3x1x128xf32>
    %154 = arith.subf %151, %153 : vector<3x1x128xf32>
    %155 = vector.extract_strided_slice %154 {offsets = [0, 0, 0], sizes = [1, 1, 128], strides = [1, 1, 1]} : vector<3x1x128xf32> to vector<1x1x128xf32>
    %156 = vector.shape_cast %155 : vector<1x1x128xf32> to vector<1x128xf32>
    %157 = vector.extract_strided_slice %154 {offsets = [0, 0, 0], sizes = [1, 1, 128], strides = [1, 1, 1]} : vector<3x1x128xf32> to vector<1x1x128xf32>
    %158 = vector.shape_cast %157 : vector<1x1x128xf32> to vector<1x128xf32>
    %159 = arith.mulf %156, %158 : vector<1x128xf32>
    %160 = vector.extract_strided_slice %154 {offsets = [1, 0, 0], sizes = [1, 1, 128], strides = [1, 1, 1]} : vector<3x1x128xf32> to vector<1x1x128xf32>
    %161 = vector.shape_cast %160 : vector<1x1x128xf32> to vector<1x128xf32>
    %162 = vector.extract_strided_slice %154 {offsets = [1, 0, 0], sizes = [1, 1, 128], strides = [1, 1, 1]} : vector<3x1x128xf32> to vector<1x1x128xf32>
    %163 = vector.shape_cast %162 : vector<1x1x128xf32> to vector<1x128xf32>
    %164 = arith.mulf %161, %163 : vector<1x128xf32>
    %165 = arith.addf %159, %164 : vector<1x128xf32>
    %166 = vector.extract_strided_slice %154 {offsets = [2, 0, 0], sizes = [1, 1, 128], strides = [1, 1, 1]} : vector<3x1x128xf32> to vector<1x1x128xf32>
    %167 = vector.shape_cast %166 : vector<1x1x128xf32> to vector<1x128xf32>
    %168 = vector.extract_strided_slice %154 {offsets = [2, 0, 0], sizes = [1, 1, 128], strides = [1, 1, 1]} : vector<3x1x128xf32> to vector<1x1x128xf32>
    %169 = vector.shape_cast %168 : vector<1x1x128xf32> to vector<1x128xf32>
    %170 = arith.mulf %167, %169 : vector<1x128xf32>
    %171 = arith.addf %165, %170 : vector<1x128xf32>
    %172 = math.rsqrt %171 : vector<1x128xf32>
    %173 = vector.broadcast %0 : f32 to vector<1x128xf32>
    %174 = arith.mulf %173, %172 : vector<1x128xf32>
    %175 = vector.shape_cast %174 : vector<1x128xf32> to vector<1x1x128xf32>
    %176 = vector.broadcast %175 : vector<1x1x128xf32> to vector<3x1x128xf32>
    %177 = arith.mulf %176, %154 : vector<3x1x128xf32>
    %178 = arith.addf %121, %177 : vector<3x1x128xf32>
    %179 = arith.subf %149, %177 : vector<3x1x128xf32>
    %180 = vector.extract_strided_slice %1 {offsets = [0, 0, 0, 0], sizes = [1, 3, 1, 128], strides = [1, 1, 1, 1]} : vector<4x3x1x128xf32> to vector<1x3x1x128xf32>
    %181 = vector.shape_cast %180 : vector<1x3x1x128xf32> to vector<3x1x128xf32>
    %182 = arith.addf %181, %90 : vector<3x1x128xf32>
    %c0_8 = arith.constant 0 : index
    %c0_9 = arith.constant 0 : index
    %c0_10 = arith.constant 0 : index
    %c0_11 = arith.constant 0 : index
    %183 = vector.load %arg3[%c0_8, %c0_9, %c0_10, %c0_11] : memref<4x3x1x128xf32, #tpu.memory_space<vmem>>, vector<1x3x1x128xf32>
    %184 = vector.shape_cast %183 : vector<1x3x1x128xf32> to vector<3x1x128xf32>
    %185 = vector.shape_cast %182 : vector<3x1x128xf32> to vector<1x3x1x128xf32>
    tpu.vector_store %arg3[%c0_8, %c0_9, %c0_10, %c0_11], %185 {strides = array<i32>} : memref<4x3x1x128xf32, #tpu.memory_space<vmem>>, vector<1x3x1x128xf32>,
    %186 = vector.extract_strided_slice %1 {offsets = [1, 0, 0, 0], sizes = [1, 3, 1, 128], strides = [1, 1, 1, 1]} : vector<4x3x1x128xf32> to vector<1x3x1x128xf32>
    %187 = vector.shape_cast %186 : vector<1x3x1x128xf32> to vector<3x1x128xf32>
    %188 = arith.addf %187, %148 : vector<3x1x128xf32>
    %c1 = arith.constant 1 : index
    %c0_12 = arith.constant 0 : index
    %c0_13 = arith.constant 0 : index
    %c0_14 = arith.constant 0 : index
    %189 = vector.load %arg3[%c1, %c0_12, %c0_13, %c0_14] : memref<4x3x1x128xf32, #tpu.memory_space<vmem>>, vector<1x3x1x128xf32>
    %190 = vector.shape_cast %189 : vector<1x3x1x128xf32> to vector<3x1x128xf32>
    %191 = vector.shape_cast %188 : vector<3x1x128xf32> to vector<1x3x1x128xf32>
    tpu.vector_store %arg3[%c1, %c0_12, %c0_13, %c0_14], %191 {strides = array<i32>} : memref<4x3x1x128xf32, #tpu.memory_space<vmem>>, vector<1x3x1x128xf32>,
    %192 = vector.extract_strided_slice %1 {offsets = [2, 0, 0, 0], sizes = [1, 3, 1, 128], strides = [1, 1, 1, 1]} : vector<4x3x1x128xf32> to vector<1x3x1x128xf32>
    %193 = vector.shape_cast %192 : vector<1x3x1x128xf32> to vector<3x1x128xf32>
    %194 = arith.addf %193, %178 : vector<3x1x128xf32>
    %c2 = arith.constant 2 : index
    %c0_15 = arith.constant 0 : index
    %c0_16 = arith.constant 0 : index
    %c0_17 = arith.constant 0 : index
    %195 = vector.load %arg3[%c2, %c0_15, %c0_16, %c0_17] : memref<4x3x1x128xf32, #tpu.memory_space<vmem>>, vector<1x3x1x128xf32>
    %196 = vector.shape_cast %195 : vector<1x3x1x128xf32> to vector<3x1x128xf32>
    %197 = vector.shape_cast %194 : vector<3x1x128xf32> to vector<1x3x1x128xf32>
    tpu.vector_store %arg3[%c2, %c0_15, %c0_16, %c0_17], %197 {strides = array<i32>} : memref<4x3x1x128xf32, #tpu.memory_space<vmem>>, vector<1x3x1x128xf32>,
    %198 = vector.extract_strided_slice %1 {offsets = [3, 0, 0, 0], sizes = [1, 3, 1, 128], strides = [1, 1, 1, 1]} : vector<4x3x1x128xf32> to vector<1x3x1x128xf32>
    %199 = vector.shape_cast %198 : vector<1x3x1x128xf32> to vector<3x1x128xf32>
    %200 = arith.addf %199, %179 : vector<3x1x128xf32>
    %c3 = arith.constant 3 : index
    %c0_18 = arith.constant 0 : index
    %c0_19 = arith.constant 0 : index
    %c0_20 = arith.constant 0 : index
    %201 = vector.load %arg3[%c3, %c0_18, %c0_19, %c0_20] : memref<4x3x1x128xf32, #tpu.memory_space<vmem>>, vector<1x3x1x128xf32>
    %202 = vector.shape_cast %201 : vector<1x3x1x128xf32> to vector<3x1x128xf32>
    %203 = vector.shape_cast %200 : vector<3x1x128xf32> to vector<1x3x1x128xf32>
    tpu.vector_store %arg3[%c3, %c0_18, %c0_19, %c0_20], %203 {strides = array<i32>} : memref<4x3x1x128xf32, #tpu.memory_space<vmem>>, vector<1x3x1x128xf32>,
    return
  }
  func.func @transform_0(%arg0: i32) -> (i32, i32) {
    %c0_i32 = arith.constant 0 : i32
    %c0_i32_0 = arith.constant 0 : i32
    %c0_i32_1 = arith.constant 0 : i32
    return %c0_i32, %c0_i32_0 : i32, i32
  }
  func.func @transform_1(%arg0: i32) -> (i32, i32, i32, i32) {
    %c0_i32 = arith.constant 0 : i32
    %c0_i32_0 = arith.constant 0 : i32
    %c0_i32_1 = arith.constant 0 : i32
    %c0_i32_2 = arith.constant 0 : i32
    return %c0_i32, %c0_i32_0, %arg0, %c0_i32_1 : i32, i32, i32, i32
  }
  func.func @transform_2(%arg0: i32) -> (i32, i32, i32, i32) {
    %c0_i32 = arith.constant 0 : i32
    %c0_i32_0 = arith.constant 0 : i32
    %c0_i32_1 = arith.constant 0 : i32
    %c0_i32_2 = arith.constant 0 : i32
    return %c0_i32, %c0_i32_0, %arg0, %c0_i32_1 : i32, i32, i32, i32
  }
}

</mosaic_0001>

<llo_original>
// kernel: backflow_transformation.1
$region0: #{backflow_transformation.1}
  #allocation0 [shape = 'u32[]', space=smem, size = 0x4, offset = 0x4, fixed_abs, tag = 'smem constant byte address 0x4 - core index']
  #allocation1 [shape = 'u32[72,128]{1,0:T(1,128)}', space=vmem, size = 0x9000, scoped, tag = 'internal scratch']
  #allocation2 [shape = 'f32[1,1]{1,0:T(1,128)S(6)}', space=smem, size = 0x200, scoped, tag = 'scoped memory for backflow_transformation.1']
  %s0 = inlined_call_operand.<no memory space> [shape: f32[1,1], index: 0, kind: input, shape index: {}]
  %s1 = inlined_call_operand.vmem [shape: f32[4,3,1,128], index: 1, kind: input, shape index: {}]
  %s2 = inlined_call_operand.vmem [shape: f32[4,3,1,128], index: 2, kind: output, shape index: {}]
  %s3 = sld [smem:[#allocation0]]
  $region18: #{backflow_transformation.1} parent=0
    _
  %s5 = ssub.s32 1, %s3
  %s6 = scalar_select 0, %s5, %s3
  %7 = sst [smem:[#allocation2]] %s0
  // Predicated region
  $region2: #{backflow_transformation.1} parent=0 // pred_check
    _
  $region3: #{backflow_transformation.1} parent=0 // pred_check_branch
    %9 = sbr.rel (0) target = $region5
  $region4: #{backflow_transformation.1} parent=0 // pred_region
    _
  $region5: #{backflow_transformation.1} parent=0 // pred_fallthru
    _
  // Predicated region
  $region6: #{backflow_transformation.1} parent=0 // pred_check
    _
  $region7: #{backflow_transformation.1} parent=0 // pred_check_branch
    %11 = sbr.rel (0) target = $region9
  $region8: #{backflow_transformation.1} parent=0 // pred_region
    _
  $region9: #{backflow_transformation.1} parent=0 // pred_fallthru
    _
  %s12 = sld [smem:[#allocation2]]
  %v13 = vld [vmem:[%s1] sm:$0x1]
  %v14 = vld [vmem:[%s1 + $0x1] sm:$0x1]
  %v15 = vld [vmem:[%s1 + $0x2] sm:$0x1]
  %v16 = vld [vmem:[%s1 + $0x3] sm:$0x1]
  %v17 = vld [vmem:[%s1 + $0x4] sm:$0x1]
  %v18 = vld [vmem:[%s1 + $0x5] sm:$0x1]
  %v19 = vld [vmem:[%s1 + $0x6] sm:$0x1]
  %v20 = vld [vmem:[%s1 + $0x7] sm:$0x1]
  %v21 = vld [vmem:[%s1 + $0x8] sm:$0x1]
  %v22 = vld [vmem:[%s1 + $0x9] sm:$0x1]
  %v23 = vld [vmem:[%s1 + $0xa] sm:$0x1]
  %v24 = vld [vmem:[%s1 + $0xb] sm:$0x1]
  %v25 = vsub.f32 %v13, %v16
  %v26 = vsub.f32 %v14, %v17
  %v27 = vsub.f32 %v15, %v18
  %v28 = vmul.f32 %v25, %v25
  %v29 = vmul.f32 %v26, %v26
  %v30 = vadd.f32 %v28, %v29
  %v31 = vmul.f32 %v27, %v27
  %v32 = vadd.f32 %v30, %v31
  %v33 = vrsqrt.pop %v32
  %v34 = vmul.f32 %v33, %v32
  %v35 = vmul.f32 %v34, %v33
  %v36 = vmul.f32 0.5, %v35
  %v37 = vsub.f32 1.5, %v36
  %v38 = vmul.f32 %v33, %v37
  %vm39 = vweird.f32 %v32
  %vm40 = vweird.f32 %v33
  %vm41 = vmor %vm39, %vm40
  %v42 = vsel %vm41, %v33, %v38
  %v43 = vstv %s12
  %v44 = vmul.f32 %v43, %v42
  %v45 = vmul.f32 %v44, %v25
  %v46 = vmul.f32 %v44, %v26
  %v47 = vmul.f32 %v44, %v27
  %v48 = vadd.f32 %v45, 0.0
  %v49 = vadd.f32 %v46, 0.0
  %v50 = vadd.f32 %v47, 0.0
  %v51 = vsub.f32 0.0, %v45
  %v52 = vsub.f32 0.0, %v46
  %v53 = vsub.f32 0.0, %v47
  %v54 = vsub.f32 %v13, %v19
  %v55 = vsub.f32 %v14, %v20
  %v56 = vsub.f32 %v15, %v21
  %v57 = vmul.f32 %v54, %v54
  %v58 = vmul.f32 %v55, %v55
  %v59 = vadd.f32 %v57, %v58
  %v60 = vmul.f32 %v56, %v56
  %v61 = vadd.f32 %v59, %v60
  %v62 = vrsqrt.pop %v61
  %v63 = vmul.f32 %v62, %v61
  %v64 = vmul.f32 %v63, %v62
  %v65 = vmul.f32 0.5, %v64
  %v66 = vsub.f32 1.5, %v65
  %v67 = vmul.f32 %v62, %v66
  %vm68 = vweird.f32 %v61
  %vm69 = vweird.f32 %v62
  %vm70 = vmor %vm68, %vm69
  %v71 = vsel %vm70, %v62, %v67
  %v72 = vmul.f32 %v43, %v71
  %v73 = vmul.f32 %v72, %v54
  %v74 = vmul.f32 %v72, %v55
  %v75 = vmul.f32 %v72, %v56
  %v76 = vadd.f32 %v48, %v73
  %v77 = vadd.f32 %v49, %v74
  %v78 = vadd.f32 %v50, %v75
  %v79 = vsub.f32 0.0, %v73
  %v80 = vsub.f32 0.0, %v74
  %v81 = vsub.f32 0.0, %v75
  %v82 = vsub.f32 %v13, %v22
  %v83 = vsub.f32 %v14, %v23
  %v84 = vsub.f32 %v15, %v24
  %v85 = vmul.f32 %v82, %v82
  %v86 = vmul.f32 %v83, %v83
  %v87 = vadd.f32 %v85, %v86
  %v88 = vmul.f32 %v84, %v84
  %v89 = vadd.f32 %v87, %v88
  %v90 = vrsqrt.pop %v89
  %v91 = vmul.f32 %v90, %v89
  %v92 = vmul.f32 %v91, %v90
  %v93 = vmul.f32 0.5, %v92
  %v94 = vsub.f32 1.5, %v93
  %v95 = vmul.f32 %v90, %v94
  %vm96 = vweird.f32 %v89
  %vm97 = vweird.f32 %v90
  %vm98 = vmor %vm96, %vm97
  %v99 = vsel %vm98, %v90, %v95
  %v100 = vmul.f32 %v43, %v99
  %v101 = vmul.f32 %v100, %v82
  %v102 = vmul.f32 %v100, %v83
  %v103 = vmul.f32 %v100, %v84
  %v104 = vadd.f32 %v76, %v101
  %v105 = vadd.f32 %v77, %v102
  %v106 = vadd.f32 %v78, %v103
  %v107 = vsub.f32 0.0, %v101
  %v108 = vsub.f32 0.0, %v102
  %v109 = vsub.f32 0.0, %v103
  %v110 = vsub.f32 %v16, %v19
  %v111 = vsub.f32 %v17, %v20
  %v112 = vsub.f32 %v18, %v21
  %v113 = vmul.f32 %v110, %v110
  %v114 = vmul.f32 %v111, %v111
  %v115 = vadd.f32 %v113, %v114
  %v116 = vmul.f32 %v112, %v112
  %v117 = vadd.f32 %v115, %v116
  %v118 = vrsqrt.pop %v117
  %v119 = vmul.f32 %v118, %v117
  %v120 = vmul.f32 %v119, %v118
  %v121 = vmul.f32 0.5, %v120
  %v122 = vsub.f32 1.5, %v121
  %v123 = vmul.f32 %v118, %v122
  %vm124 = vweird.f32 %v117
  %vm125 = vweird.f32 %v118
  %vm126 = vmor %vm124, %vm125
  %v127 = vsel %vm126, %v118, %v123
  %v128 = vmul.f32 %v43, %v127
  %v129 = vmul.f32 %v128, %v110
  %v130 = vmul.f32 %v128, %v111
  %v131 = vmul.f32 %v128, %v112
  %v132 = vadd.f32 %v51, %v129
  %v133 = vadd.f32 %v52, %v130
  %v134 = vadd.f32 %v53, %v131
  %v135 = vsub.f32 %v79, %v129
  %v136 = vsub.f32 %v80, %v130
  %v137 = vsub.f32 %v81, %v131
  %v138 = vsub.f32 %v16, %v22
  %v139 = vsub.f32 %v17, %v23
  %v140 = vsub.f32 %v18, %v24
  %v141 = vmul.f32 %v138, %v138
  %v142 = vmul.f32 %v139, %v139
  %v143 = vadd.f32 %v141, %v142
  %v144 = vmul.f32 %v140, %v140
  %v145 = vadd.f32 %v143, %v144
  %v146 = vrsqrt.pop %v145
  %v147 = vmul.f32 %v146, %v145
  %v148 = vmul.f32 %v147, %v146
  %v149 = vmul.f32 0.5, %v148
  %v150 = vsub.f32 1.5, %v149
  %v151 = vmul.f32 %v146, %v150
  %vm152 = vweird.f32 %v145
  %vm153 = vweird.f32 %v146
  %vm154 = vmor %vm152, %vm153
  %v155 = vsel %vm154, %v146, %v151
  %v156 = vmul.f32 %v43, %v155
  %v157 = vmul.f32 %v156, %v138
  %v158 = vmul.f32 %v156, %v139
  %v159 = vmul.f32 %v156, %v140
  %v160 = vadd.f32 %v132, %v157
  %v161 = vadd.f32 %v133, %v158
  %v162 = vadd.f32 %v134, %v159
  %v163 = vsub.f32 %v107, %v157
  %v164 = vsub.f32 %v108, %v158
  %v165 = vsub.f32 %v109, %v159
  %v166 = vsub.f32 %v19, %v22
  %v167 = vsub.f32 %v20, %v23
  %v168 = vsub.f32 %v21, %v24
  %v169 = vmul.f32 %v166, %v166
  %v170 = vmul.f32 %v167, %v167
  %v171 = vadd.f32 %v169, %v170
  %v172 = vmul.f32 %v168, %v168
  %v173 = vadd.f32 %v171, %v172
  %v174 = vrsqrt.pop %v173
  %v175 = vmul.f32 %v174, %v173
  %v176 = vmul.f32 %v175, %v174
  %v177 = vmul.f32 0.5, %v176
  %v178 = vsub.f32 1.5, %v177
  %v179 = vmul.f32 %v174, %v178
  %vm180 = vweird.f32 %v173
  %vm181 = vweird.f32 %v174
  %vm182 = vmor %vm180, %vm181
  %v183 = vsel %vm182, %v174, %v179
  %v184 = vmul.f32 %v43, %v183
  %v185 = vmul.f32 %v184, %v166
  %v186 = vmul.f32 %v184, %v167
  %v187 = vmul.f32 %v184, %v168
  %v188 = vadd.f32 %v135, %v185
  %v189 = vadd.f32 %v136, %v186
  %v190 = vadd.f32 %v137, %v187
  %v191 = vsub.f32 %v163, %v185
  %v192 = vsub.f32 %v164, %v186
  %v193 = vsub.f32 %v165, %v187
  %v194 = vadd.f32 %v13, %v104
  %v195 = vadd.f32 %v14, %v105
  %v196 = vadd.f32 %v15, %v106
  %197 = vst [vmem:[%s2] sm:$0x1] %v194
  %198 = vst [vmem:[%s2 + $0x1] sm:$0x1] %v195
  %199 = vst [vmem:[%s2 + $0x2] sm:$0x1] %v196
  %v200 = vadd.f32 %v16, %v160
  %v201 = vadd.f32 %v17, %v161
  %v202 = vadd.f32 %v18, %v162
  %s203 = scalar_lea.vmem %s2, 3
  %204 = vst [vmem:[%s203] sm:$0x1] %v200
  %205 = vst [vmem:[%s203 + $0x1] sm:$0x1] %v201
  %206 = vst [vmem:[%s203 + $0x2] sm:$0x1] %v202
  %v207 = vadd.f32 %v19, %v188
  %v208 = vadd.f32 %v20, %v189
  %v209 = vadd.f32 %v21, %v190
  %s210 = scalar_lea.vmem %s2, 6
  %211 = vst [vmem:[%s210] sm:$0x1] %v207
  %212 = vst [vmem:[%s210 + $0x1] sm:$0x1] %v208
  %213 = vst [vmem:[%s210 + $0x2] sm:$0x1] %v209
  %v214 = vadd.f32 %v22, %v191
  %v215 = vadd.f32 %v23, %v192
  %v216 = vadd.f32 %v24, %v193
  %s217 = scalar_lea.vmem %s2, 9
  %218 = vst [vmem:[%s217] sm:$0x1] %v214
  %219 = vst [vmem:[%s217 + $0x1] sm:$0x1] %v215
  %220 = vst [vmem:[%s217 + $0x2] sm:$0x1] %v216
  // Predicated region
  $region10: #{backflow_transformation.1} parent=0 // pred_check
    _
  $region11: #{backflow_transformation.1} parent=0 // pred_check_branch
    %222 = sbr.rel (0) target = $region13
  $region12: #{backflow_transformation.1} parent=0 // pred_region
    _
  $region13: #{backflow_transformation.1} parent=0 // pred_fallthru
    _
  // Predicated region
  $region14: #{backflow_transformation.1} parent=0 // pred_check
    _
  $region15: #{backflow_transformation.1} parent=0 // pred_check_branch
    %224 = sbr.rel (0) target = $region17
  $region16: #{backflow_transformation.1} parent=0 // pred_region
    _
  $region17: #{backflow_transformation.1} parent=0 // pred_fallthru
    _

</llo_original>
